<compile_context>
chip_gen: v7x
topology: tpu7x:2x2x1
jax: 0.10.0
libtpu: 0.0.40
codegen_flags: <defaults>
</compile_context>

<pallas_src>
import jax
import jax.numpy as jnp
from jax.experimental import pallas as pl
from jax.experimental.pallas import tpu as pltpu


NEG_BIG = -1e30  # finite "-inf" for padded vocab columns (avoids inf-inf NaN risk)


def _round_up(x, m):
    return pl.cdiv(x, m) * m


def _ibm1_kernel(x_ref, wa_ref, w1_ref, b1_ref, w2_ref, b2_ref, out_ref,
                 h_ref, m_ref, l_ref, s_ref):
    # x_ref  : (TB*Lx, E)  bf16   (fetched once per batch tile; index map constant in p,v)
    # wa_ref : (TB*Lx, 1)  f32
    # w1_ref : (E, H) bf16 ; b1_ref : (1, H) f32
    # w2_ref : (H, TV) bf16 vocab tile ; b2_ref : (1, TV) f32 vocab tile
    # out_ref: (TB, TV) f32
    # scratch: h_ref (TB*Lx, H) bf16 ; m_ref/l_ref/s_ref (TB*Lx, 1) f32
    p = pl.program_id(1)
    v = pl.program_id(2)
    last_pass = pl.num_programs(1) - 1

    TB, TV = out_ref.shape
    rows = x_ref.shape[0]
    Lx = rows // TB

    # Hidden layer (Linear -> ReLU) + stats init: once per batch tile.
    @pl.when(jnp.logical_and(p == 0, v == 0))
    def _():
        h = jnp.dot(x_ref[...], w1_ref[...],
                    preferred_element_type=jnp.float32) + b1_ref[...]
        h_ref[...] = jnp.maximum(h, 0.0).astype(h_ref.dtype)      # bf16 MXU operand
        m_ref[...] = jnp.full_like(m_ref, -jnp.inf)
        l_ref[...] = jnp.zeros_like(l_ref)

    # Logits for this vocab tile (h stays resident in VMEM scratch).
    logits = jnp.dot(h_ref[...], w2_ref[...],
                     preferred_element_type=jnp.float32) + b2_ref[...]     # (rows, TV) f32

    # Pass 0: online logsumexp statistics across the vocab tiles.
    @pl.when(p == 0)
    def _():
        m_old = m_ref[...]
        m_new = jnp.maximum(m_old, jnp.max(logits, axis=-1, keepdims=True))
        l_ref[...] = (l_ref[...] * jnp.exp(m_old - m_new)
                      + jnp.sum(jnp.exp(logits - m_new), axis=-1, keepdims=True))
        m_ref[...] = m_new

    # Fold alignment weight (mask/len) and softmax denominator into one per-row scale,
    # so p = e/denom is never materialized.
    @pl.when(jnp.logical_and(p == last_pass, v == 0))
    def _():
        s_ref[...] = wa_ref[...] * pl.reciprocal(l_ref[...], approx=True)

    # Last pass: emit this vocab tile of the marginal (weighted sublane reduce over Lx).
    @pl.when(p == last_pass)
    def _():
        e = jnp.exp(logits - m_ref[...])                          # (rows, TV) f32
        weighted = (e * s_ref[...]).reshape(TB, Lx, TV)
        out_ref[...] = jnp.sum(weighted, axis=1)                  # (TB, TV)


def neural_ibm1_forward(x_embed, seq_mask_x, seq_len_x, longest_y,
                        w1, b1, w2, b2, *, batch_tile=None, vocab_tile=512):
    """Pallas implementation of NeuralIBM1.forward (given precomputed embeddings)."""
    B, Lx, E = x_embed.shape
    H = w1.shape[1]
    V = w2.shape[1]

    # p_align = mask / len (uniform over non-pad source tokens), computed once in XLA.
    # TODO(synk): rows that are entirely padding (seq_len_x == 0) give inf/NaN, exactly
    #             like the torch reference; clamp upstream if that case can occur.
    w_align = (seq_mask_x.astype(jnp.float32)
               / seq_len_x.reshape(B, 1).astype(jnp.float32))              # (B, Lx)

    # ---- batch tile: multiple of 8 so the (TB, TV) output block is sublane-dense ----
    if batch_tile is None:
        tb = _round_up(max(1, pl.cdiv(256, Lx)), 8)         # TB*Lx >= 256 MXU rows
    else:
        tb = _round_up(max(1, batch_tile), 8)
    tb = min(tb, _round_up(B, 8))
    # v7x has 2 TensorCores: if the whole batch would be a single grid step, split it in
    # two (parallel axis work for both TCs) as long as the MXU M dim stays >= 256.
    if _round_up(B, tb) == tb and tb % 16 == 0 and (tb // 2) * Lx >= 256:
        tb //= 2
    TB = tb
    Bp = _round_up(B, TB)

    # ---- vocab tile: lane-dense; streams W2 so VMEM stays bounded at large vocab ----
    TV = min(_round_up(max(128, vocab_tile), 128), _round_up(V, 128))
    Vp = _round_up(V, TV)
    NV = Vp // TV
    n_pass = 1 if NV == 1 else 2    # two-pass (stats sweep, then output sweep) iff tiled

    # ---- pad / flatten / cast (bf16 MXU operands; f32 accumulate + softmax) ----
    x_embed = x_embed.astype(jnp.bfloat16)
    if Bp != B:
        x_embed = jnp.pad(x_embed, ((0, Bp - B), (0, 0), (0, 0)))
        w_align = jnp.pad(w_align, ((0, Bp - B), (0, 0)))
    x_flat = x_embed.reshape(Bp * Lx, E)
    wa_flat = w_align.reshape(Bp * Lx, 1)

    w1 = w1.astype(jnp.bfloat16)
    b1 = b1.reshape(1, H).astype(jnp.float32)
    w2 = w2.astype(jnp.bfloat16)
    b2 = b2.reshape(1, V).astype(jnp.float32)
    if Vp != V:
        w2 = jnp.pad(w2, ((0, 0), (0, Vp - V)))
        b2 = jnp.pad(b2, ((0, 0), (0, Vp - V)), constant_values=NEG_BIG)

    rows = TB * Lx

    # VMEM budget: double-buffered tiles + resident scratch + live f32 intermediates.
    est = (2 * rows * E * 2 + 2 * rows * 4            # x tile (bf16) + wa tile
           + 2 * (E * H * 2 + H * 4)                  # W1 + b1
           + 2 * (H * TV * 2 + TV * 4)                # W2 tile + b2 tile
           + 2 * TB * TV * 4                          # output tile
           + rows * H * 2 + 3 * rows * 4              # scratch: h, m, l, s
           + 4 * rows * TV * 4)                       # logits / e / weighted + slack
    vmem_limit = int(min(max(2 * est, 32 * 2 ** 20), 64 * 2 ** 20))

    if n_pass == 1:
        out_map = lambda b, p, v: (b, v)
    else:
        out_map = lambda b, p, v: (b, v * p)   # pass 0 parks on block (b, 0); no write

    marg = pl.pallas_call(
        _ibm1_kernel,
        out_shape=jax.ShapeDtypeStruct((Bp, Vp), jnp.float32),
        grid_spec=pltpu.PrefetchScalarGridSpec(
            num_scalar_prefetch=0,
            grid=(Bp // TB, n_pass, NV),
            in_specs=[
                pl.BlockSpec((rows, E), lambda b, p, v: (b, 0)),  # x (bf16), 1 DMA/batch tile
                pl.BlockSpec((rows, 1), lambda b, p, v: (b, 0)),  # alignment weights
                pl.BlockSpec((E, H), lambda b, p, v: (0, 0)),     # W1 (grid-invariant)
                pl.BlockSpec((1, H), lambda b, p, v: (0, 0)),     # b1
                pl.BlockSpec((H, TV), lambda b, p, v: (0, v)),    # W2 vocab tile (streamed)
                pl.BlockSpec((1, TV), lambda b, p, v: (0, v)),    # b2 vocab tile
            ],
            out_specs=pl.BlockSpec((TB, TV), out_map),
            scratch_shapes=[
                pltpu.VMEM((rows, H), jnp.bfloat16),   # hidden layer (resident per tile)
                pltpu.VMEM((rows, 1), jnp.float32),    # running max
                pltpu.VMEM((rows, 1), jnp.float32),    # running denom
                pltpu.VMEM((rows, 1), jnp.float32),    # wa / denom
            ],
        ),
        compiler_params=pltpu.CompilerParams(
            dimension_semantics=("parallel", "arbitrary", "arbitrary"),
            vmem_limit_bytes=vmem_limit),
    )(x_flat, wa_flat, w1, b1, w2, b2)

    marg = marg[:B, :V].reshape(B, 1, V)
    # Broadcast over target length outside the kernel (no Ly-fold HBM writeback).
    return jnp.broadcast_to(marg, (B, longest_y, V))


def reference_forward(x_embed, seq_mask_x, seq_len_x, y, w1, b1, w2, b2):
    B, Lx, E = x_embed.shape
    V = w2.shape[1]
    h = jnp.maximum(x_embed.reshape(B * Lx, E) @ w1 + b1, 0.0)
    logits = h @ w2 + b2
    p = jax.nn.softmax(logits, axis=-1).reshape(B, Lx, V)
    p_align = seq_mask_x.astype(jnp.float32) / seq_len_x[:, None].astype(jnp.float32)
    Ly = y.shape[1]
    p_align = jnp.repeat(p_align[:, None, :], Ly, axis=1)          # (B, Ly, Lx)
    return jnp.einsum("bji,biv->bjv", p_align, p)


def _run_case(key, *, B, Lx, Ly, E, H, V, src_vocab, pad_idx=0,
              vocab_tile=512, batch_tile=None):
    k_emb, k_w1, k_b1, k_w2, k_b2, k_x, k_y = jax.random.split(key, 7)

    # nn.Embedding(src_vocab, E, padding_idx=pad_idx): pad row zeroed.
    emb_table = jax.random.normal(k_emb, (src_vocab, E), jnp.float32) * 0.1
    emb_table = emb_table.at[pad_idx].set(0.0)

    # nn.Linear weights, stored as (in, out).
    w1 = jax.random.normal(k_w1, (E, H), jnp.float32) * 0.1
    b1 = jax.random.normal(k_b1, (1, H), jnp.float32) * 0.1
    w2 = jax.random.normal(k_w2, (H, V), jnp.float32) * 0.1
    b2 = jax.random.normal(k_b2, (1, V), jnp.float32) * 0.1

    # Source tokens with some padding at the tail (no fully-padded rows).
    x = jax.random.randint(k_x, (B, Lx), 1, src_vocab, dtype=jnp.int32)
    x = x.at[0, Lx - 2:].set(pad_idx)
    if B > 1:
        x = x.at[1, Lx - 3:].set(pad_idx)
    y = jax.random.randint(k_y, (B, Ly), 1, V, dtype=jnp.int32)

    seq_mask_x = (x != pad_idx)
    seq_len_x = jnp.sum(seq_mask_x.astype(jnp.int32), axis=-1)     # (B,)

    # Embedding lookup (glue, plain JAX gather).
    x_embed = emb_table[x]                                         # (B, Lx, E)

    out = neural_ibm1_forward(x_embed, seq_mask_x, seq_len_x, Ly, w1, b1, w2, b2,
                              batch_tile=batch_tile, vocab_tile=vocab_tile)
    out = jax.block_until_ready(out)

    ref = reference_forward(x_embed, seq_mask_x, seq_len_x, y, w1, b1, w2, b2)
    assert out.shape == (B, Ly, V)
    max_err = float(jnp.max(jnp.abs(out - ref)))
    # bf16 MXU operands + approx reciprocal -> loosened tolerance vs the f32 reference.
    assert jnp.allclose(out, ref, rtol=2e-2, atol=1e-4), max_err
    return max_err


if __name__ == "__main__":
    key = jax.random.PRNGKey(0)
    k1, k2 = jax.random.split(key)

    # Case 1: small vocab -> single-pass path (NV == 1), grid (1, 1, 1).
    _run_case(k1, B=8, Lx=8, Ly=8, E=32, H=32, V=128, src_vocab=32)

    # Case 2: vocab-tiled two-pass path with batch + vocab padding
    # (V=300 -> 3 tiles of 128, B=5 -> padded to 8), grid (1, 2, 3).
    _run_case(k2, B=5, Lx=8, Ly=3, E=16, H=64, V=300, src_vocab=50, vocab_tile=128)

    print("KERNEL_OK")
</pallas_src>

<mosaic_0001>
module attributes {stable_mosaic.version = 11 : i64} {
  func.func @_ibm1_kernel(%arg0: i32, %arg1: i32, %arg2: i32, %arg3: memref<64x32xbf16, #tpu.memory_space<vmem>>, %arg4: memref<64x1xf32, #tpu.memory_space<vmem>>, %arg5: memref<32x32xbf16, #tpu.memory_space<vmem>>, %arg6: memref<1x32xf32, #tpu.memory_space<vmem>>, %arg7: memref<32x128xbf16, #tpu.memory_space<vmem>>, %arg8: memref<1x128xf32, #tpu.memory_space<vmem>>, %arg9: memref<8x128xf32, #tpu.memory_space<vmem>>, %arg10: memref<64x32xbf16, #tpu.memory_space<vmem>>, %arg11: memref<64x1xf32, #tpu.memory_space<vmem>>, %arg12: memref<64x1xf32, #tpu.memory_space<vmem>>, %arg13: memref<64x1xf32, #tpu.memory_space<vmem>>) attributes {dimension_semantics = [#tpu.dimension_semantics<parallel>, #tpu.dimension_semantics<arbitrary>, #tpu.dimension_semantics<arbitrary>], iteration_bounds = array<i64: 1, 1, 1>, scalar_prefetch = 0 : i64, scratch_operands = 4 : i64, tpu.core_type = #tpu.core_type<tc>, window_params = [{transform_indices = @transform_0, window_bounds = array<i64: 64, 32>}, {transform_indices = @transform_1, window_bounds = array<i64: 64, 1>}, {pipeline_mode = #tpu.pipeline_mode<synchronous>, transform_indices = @transform_2, window_bounds = array<i64: 32, 32>}, {pipeline_mode = #tpu.pipeline_mode<synchronous>, transform_indices = @transform_3, window_bounds = array<i64: 1, 32>}, {transform_indices = @transform_4, window_bounds = array<i64: 32, 128>}, {transform_indices = @transform_5, window_bounds = array<i64: 1, 128>}, {transform_indices = @transform_6, window_bounds = array<i64: 8, 128>}]} {
    %c0_i32 = arith.constant 0 : i32
    %0 = arith.cmpi eq, %arg1, %c0_i32 : i32
    %c0_i32_0 = arith.constant 0 : i32
    %1 = arith.cmpi eq, %arg2, %c0_i32_0 : i32
    %2 = arith.andi %0, %1 : i1
    %3 = arith.extui %2 : i1 to i32
    %c0_i32_1 = arith.constant 0 : i32
    %4 = arith.cmpi ne, %3, %c0_i32_1 : i32
    scf.if %4 {
      %c0_14 = arith.constant 0 : index
      %c0_15 = arith.constant 0 : index
      %22 = vector.load %arg3[%c0_14, %c0_15] : memref<64x32xbf16, #tpu.memory_space<vmem>>, vector<64x32xbf16>
      %c0_16 = arith.constant 0 : index
      %c0_17 = arith.constant 0 : index
      %23 = vector.load %arg5[%c0_16, %c0_17] : memref<32x32xbf16, #tpu.memory_space<vmem>>, vector<32x32xbf16>
      %cst_18 = arith.constant dense<0.000000e+00> : vector<64x32xf32>
      %24 = tpu.matmul %22, %23, %cst_18 {dimension_numbers = #tpu.dot_dimension_numbers<[1], [0], [0], [1], [0, 0, 1, 1], [], []>} : vector<64x32xbf16>, vector<32x32xbf16>, vector<64x32xf32> -> vector<64x32xf32>
      %c0_19 = arith.constant 0 : index
      %c0_20 = arith.constant 0 : index
      %25 = vector.load %arg6[%c0_19, %c0_20] : memref<1x32xf32, #tpu.memory_space<vmem>>, vector<1x32xf32>
      %26 = vector.broadcast %25 : vector<1x32xf32> to vector<64x32xf32>
      %27 = arith.addf %24, %26 : vector<64x32xf32>
      %cst_21 = arith.constant 0.000000e+00 : f32
      %28 = vector.broadcast %cst_21 : f32 to vector<64x32xf32>
      %29 = arith.maximumf %27, %28 : vector<64x32xf32>
      %30 = arith.truncf %29 : vector<64x32xf32> to vector<64x32xbf16>
      %c0_22 = arith.constant 0 : index
      %c0_23 = arith.constant 0 : index
      %31 = vector.load %arg10[%c0_22, %c0_23] : memref<64x32xbf16, #tpu.memory_space<vmem>>, vector<64x32xbf16>
      tpu.vector_store %arg10[%c0_22, %c0_23], %30 {strides = array<i32>} : memref<64x32xbf16, #tpu.memory_space<vmem>>, vector<64x32xbf16>,
      %cst_24 = arith.constant 0xFF800000 : f32
      %32 = vector.broadcast %cst_24 : f32 to vector<64x1xf32>
      %c0_25 = arith.constant 0 : index
      %c0_26 = arith.constant 0 : index
      %33 = vector.load %arg11[%c0_25, %c0_26] : memref<64x1xf32, #tpu.memory_space<vmem>>, vector<64x1xf32>
      tpu.vector_store %arg11[%c0_25, %c0_26], %32 {strides = array<i32>} : memref<64x1xf32, #tpu.memory_space<vmem>>, vector<64x1xf32>,
      %cst_27 = arith.constant 0.000000e+00 : f32
      %34 = vector.broadcast %cst_27 : f32 to vector<64x1xf32>
      %c0_28 = arith.constant 0 : index
      %c0_29 = arith.constant 0 : index
      %35 = vector.load %arg12[%c0_28, %c0_29] : memref<64x1xf32, #tpu.memory_space<vmem>>, vector<64x1xf32>
      tpu.vector_store %arg12[%c0_28, %c0_29], %34 {strides = array<i32>} : memref<64x1xf32, #tpu.memory_space<vmem>>, vector<64x1xf32>,
    } else {
    }
    %c0 = arith.constant 0 : index
    %c0_2 = arith.constant 0 : index
    %5 = vector.load %arg10[%c0, %c0_2] : memref<64x32xbf16, #tpu.memory_space<vmem>>, vector<64x32xbf16>
    %c0_3 = arith.constant 0 : index
    %c0_4 = arith.constant 0 : index
    %6 = vector.load %arg7[%c0_3, %c0_4] : memref<32x128xbf16, #tpu.memory_space<vmem>>, vector<32x128xbf16>
    %cst = arith.constant dense<0.000000e+00> : vector<64x128xf32>
    %7 = tpu.matmul %5, %6, %cst {dimension_numbers = #tpu.dot_dimension_numbers<[1], [0], [0], [1], [0, 0, 1, 1], [], []>} : vector<64x32xbf16>, vector<32x128xbf16>, vector<64x128xf32> -> vector<64x128xf32>
    %c0_5 = arith.constant 0 : index
    %c0_6 = arith.constant 0 : index
    %8 = vector.load %arg8[%c0_5, %c0_6] : memref<1x128xf32, #tpu.memory_space<vmem>>, vector<1x128xf32>
    %9 = vector.broadcast %8 : vector<1x128xf32> to vector<64x128xf32>
    %10 = arith.addf %7, %9 : vector<64x128xf32>
    %c0_i32_7 = arith.constant 0 : i32
    %11 = arith.cmpi eq, %arg1, %c0_i32_7 : i32
    %12 = arith.extui %11 : i1 to i32
    %c0_i32_8 = arith.constant 0 : i32
    %13 = arith.cmpi ne, %12, %c0_i32_8 : i32
    scf.if %13 {
      %c0_14 = arith.constant 0 : index
      %c0_15 = arith.constant 0 : index
      %22 = vector.load %arg11[%c0_14, %c0_15] : memref<64x1xf32, #tpu.memory_space<vmem>>, vector<64x1xf32>
      %cst_16 = arith.constant dense<0xFF800000> : vector<64xf32>
      %23 = vector.multi_reduction <maximumf>, %10, %cst_16 [1] : vector<64x128xf32> to vector<64xf32>
      %24 = vector.shape_cast %23 : vector<64xf32> to vector<64x1xf32>
      %25 = arith.maximumf %22, %24 : vector<64x1xf32>
      %c0_17 = arith.constant 0 : index
      %c0_18 = arith.constant 0 : index
      %26 = vector.load %arg12[%c0_17, %c0_18] : memref<64x1xf32, #tpu.memory_space<vmem>>, vector<64x1xf32>
      %27 = arith.subf %22, %25 : vector<64x1xf32>
      %28 = math.exp %27 : vector<64x1xf32>
      %29 = arith.mulf %26, %28 : vector<64x1xf32>
      %30 = vector.broadcast %25 : vector<64x1xf32> to vector<64x128xf32>
      %31 = arith.subf %10, %30 : vector<64x128xf32>
      %32 = math.exp %31 : vector<64x128xf32>
      %cst_19 = arith.constant dense<0.000000e+00> : vector<64xf32>
      %33 = vector.multi_reduction <add>, %32, %cst_19 [1] : vector<64x128xf32> to vector<64xf32>
      %34 = vector.shape_cast %33 : vector<64xf32> to vector<64x1xf32>
      %35 = arith.addf %29, %34 : vector<64x1xf32>
      %c0_20 = arith.constant 0 : index
      %c0_21 = arith.constant 0 : index
      %36 = vector.load %arg12[%c0_20, %c0_21] : memref<64x1xf32, #tpu.memory_space<vmem>>, vector<64x1xf32>
      tpu.vector_store %arg12[%c0_20, %c0_21], %35 {strides = array<i32>} : memref<64x1xf32, #tpu.memory_space<vmem>>, vector<64x1xf32>,
      %c0_22 = arith.constant 0 : index
      %c0_23 = arith.constant 0 : index
      %37 = vector.load %arg11[%c0_22, %c0_23] : memref<64x1xf32, #tpu.memory_space<vmem>>, vector<64x1xf32>
      tpu.vector_store %arg11[%c0_22, %c0_23], %25 {strides = array<i32>} : memref<64x1xf32, #tpu.memory_space<vmem>>, vector<64x1xf32>,
    } else {
    }
    %c0_i32_9 = arith.constant 0 : i32
    %14 = arith.cmpi eq, %arg1, %c0_i32_9 : i32
    %c0_i32_10 = arith.constant 0 : i32
    %15 = arith.cmpi eq, %arg2, %c0_i32_10 : i32
    %16 = arith.andi %14, %15 : i1
    %17 = arith.extui %16 : i1 to i32
    %c0_i32_11 = arith.constant 0 : i32
    %18 = arith.cmpi ne, %17, %c0_i32_11 : i32
    scf.if %18 {
      %c0_14 = arith.constant 0 : index
      %c0_15 = arith.constant 0 : index
      %22 = vector.load %arg4[%c0_14, %c0_15] : memref<64x1xf32, #tpu.memory_space<vmem>>, vector<64x1xf32>
      %c0_16 = arith.constant 0 : index
      %c0_17 = arith.constant 0 : index
      %23 = vector.load %arg12[%c0_16, %c0_17] : memref<64x1xf32, #tpu.memory_space<vmem>>, vector<64x1xf32>
      %24 = tpu.reciprocal %23 {approx = true} : vector<64x1xf32> -> vector<64x1xf32>
      %25 = arith.mulf %22, %24 : vector<64x1xf32>
      %c0_18 = arith.constant 0 : index
      %c0_19 = arith.constant 0 : index
      %26 = vector.load %arg13[%c0_18, %c0_19] : memref<64x1xf32, #tpu.memory_space<vmem>>, vector<64x1xf32>
      tpu.vector_store %arg13[%c0_18, %c0_19], %25 {strides = array<i32>} : memref<64x1xf32, #tpu.memory_space<vmem>>, vector<64x1xf32>,
    } else {
    }
    %c0_i32_12 = arith.constant 0 : i32
    %19 = arith.cmpi eq, %arg1, %c0_i32_12 : i32
    %20 = arith.extui %19 : i1 to i32
    %c0_i32_13 = arith.constant 0 : i32
    %21 = arith.cmpi ne, %20, %c0_i32_13 : i32
    scf.if %21 {
      %c0_14 = arith.constant 0 : index
      %c0_15 = arith.constant 0 : index
      %22 = vector.load %arg11[%c0_14, %c0_15] : memref<64x1xf32, #tpu.memory_space<vmem>>, vector<64x1xf32>
      %23 = vector.broadcast %22 : vector<64x1xf32> to vector<64x128xf32>
      %24 = arith.subf %10, %23 : vector<64x128xf32>
      %25 = math.exp %24 : vector<64x128xf32>
      %c0_16 = arith.constant 0 : index
      %c0_17 = arith.constant 0 : index
      %26 = vector.load %arg13[%c0_16, %c0_17] : memref<64x1xf32, #tpu.memory_space<vmem>>, vector<64x1xf32>
      %27 = vector.broadcast %26 : vector<64x1xf32> to vector<64x128xf32>
      %28 = arith.mulf %25, %27 : vector<64x128xf32>
      %29 = vector.shape_cast %28 : vector<64x128xf32> to vector<8x8x128xf32>
      %cst_18 = arith.constant dense<0.000000e+00> : vector<8x128xf32>
      %30 = vector.multi_reduction <add>, %29, %cst_18 [1] : vector<8x8x128xf32> to vector<8x128xf32>
      %c0_19 = arith.constant 0 : index
      %c0_20 = arith.constant 0 : index
      %31 = vector.load %arg9[%c0_19, %c0_20] : memref<8x128xf32, #tpu.memory_space<vmem>>, vector<8x128xf32>
      tpu.vector_store %arg9[%c0_19, %c0_20], %30 {strides = array<i32>} : memref<8x128xf32, #tpu.memory_space<vmem>>, vector<8x128xf32>,
    } else {
    }
    return
  }
  func.func @transform_0(%arg0: i32, %arg1: i32, %arg2: i32) -> (i32, i32) {
    %c0_i32 = arith.constant 0 : i32
    %c0_i32_0 = arith.constant 0 : i32
    return %arg0, %c0_i32 : i32, i32
  }
  func.func @transform_1(%arg0: i32, %arg1: i32, %arg2: i32) -> (i32, i32) {
    %c0_i32 = arith.constant 0 : i32
    %c0_i32_0 = arith.constant 0 : i32
    return %arg0, %c0_i32 : i32, i32
  }
  func.func @transform_2(%arg0: i32, %arg1: i32, %arg2: i32) -> (i32, i32) {
    %c0_i32 = arith.constant 0 : i32
    %c0_i32_0 = arith.constant 0 : i32
    %c0_i32_1 = arith.constant 0 : i32
    return %c0_i32, %c0_i32_0 : i32, i32
  }
  func.func @transform_3(%arg0: i32, %arg1: i32, %arg2: i32) -> (i32, i32) {
    %c0_i32 = arith.constant 0 : i32
    %c0_i32_0 = arith.constant 0 : i32
    %c0_i32_1 = arith.constant 0 : i32
    return %c0_i32, %c0_i32_0 : i32, i32
  }
  func.func @transform_4(%arg0: i32, %arg1: i32, %arg2: i32) -> (i32, i32) {
    %c0_i32 = arith.constant 0 : i32
    %c0_i32_0 = arith.constant 0 : i32
    return %c0_i32, %arg2 : i32, i32
  }
  func.func @transform_5(%arg0: i32, %arg1: i32, %arg2: i32) -> (i32, i32) {
    %c0_i32 = arith.constant 0 : i32
    %c0_i32_0 = arith.constant 0 : i32
    return %c0_i32, %arg2 : i32, i32
  }
  func.func @transform_6(%arg0: i32, %arg1: i32, %arg2: i32) -> (i32, i32) {
    %c0_i32 = arith.constant 0 : i32
    return %arg0, %arg2 : i32, i32
  }
}

</mosaic_0001>

<llo_original>
// kernel: tpu_custom_call.1
$region0: #{tpu_custom_call.1}
  #allocation0 [shape = 'u32[]', space=smem, size = 0x4, offset = 0x4, fixed_abs, tag = 'smem constant byte address 0x4 - core index']
  #allocation1 [shape = 'u32[144,128]{1,0:T(1,128)}', space=vmem, size = 0x12000, scoped, tag = 'internal scratch']
  #allocation2 [shape = 'bf16[64,32]{1,0:T(16,128)(2,1)}', space=vmem, size = 0x4000, scoped, tag = 'scratch operand']
  #allocation3 [shape = 'f32[64,1]{1,0:T(8,128)}', space=vmem, size = 0x8000, scoped, tag = 'scratch operand']
  #allocation4 [shape = 'f32[64,1]{1,0:T(8,128)}', space=vmem, size = 0x8000, scoped, tag = 'scratch operand']
  #allocation5 [shape = 'f32[64,1]{1,0:T(8,128)}', space=vmem, size = 0x8000, scoped, tag = 'scratch operand']
  %s0 = inlined_call_operand.vmem [shape: bf16[64,32], index: 0, kind: input, shape index: {}]
  %s1 = inlined_call_operand.vmem [shape: f32[64,1], index: 1, kind: input, shape index: {}]
  %s2 = inlined_call_operand.vmem [shape: bf16[32,32], index: 2, kind: input, shape index: {}]
  %s3 = inlined_call_operand.vmem [shape: f32[1,32], index: 3, kind: input, shape index: {}]
  %s4 = inlined_call_operand.vmem [shape: bf16[32,128], index: 4, kind: input, shape index: {}]
  %s5 = inlined_call_operand.vmem [shape: f32[1,128], index: 5, kind: input, shape index: {}]
  %s6 = inlined_call_operand.hbm [shape: f32[8,128], index: 6, kind: output, shape index: {}]
  %s7 = sld [smem:[#allocation0]]
  $region50: #{tpu_custom_call.1} parent=0
    _
  %s9 = ssub.s32 1, %s7
  %s10 = scalar_select 0, %s9, %s7
  $region1: #{tpu_custom_call.1} parent=0
    #allocation6 [shape = 'u8[4096]{0}', space=vmem, size = 0x1000, scoped, tag = 'output window, operand 0, single buffered']
    #allocation7 [shape = 's32[1]{0}', space=sflag, size = 0x4, scoped, tag = 'scoped memory for tpu_custom_call.1']
    %11 = vsyncpa [#allocation7], 0
    // Predicated region
    $region2: #{tpu_custom_call.1} parent=1 // pred_check
      _
    $region3: #{tpu_custom_call.1} parent=1 // pred_check_branch
      %13 = sbr.rel (0) target = $region5
    $region4: #{tpu_custom_call.1} parent=1 // pred_region
      _
    $region5: #{tpu_custom_call.1} parent=1 // pred_fallthru
      _
    // Predicated region
    $region6: #{tpu_custom_call.1} parent=1 // pred_check
      _
    $region7: #{tpu_custom_call.1} parent=1 // pred_check_branch
      %15 = sbr.rel (0) target = $region9
    $region8: #{tpu_custom_call.1} parent=1 // pred_region
      _
    $region9: #{tpu_custom_call.1} parent=1 // pred_fallthru
      _
    // Predicated region
    $region10: #{tpu_custom_call.1} parent=1 // pred_check
      _
    $region11: #{tpu_custom_call.1} parent=1 // pred_check_branch
      %17 = sbr.rel (0) target = $region13
    $region12: #{tpu_custom_call.1} parent=1 // pred_region
      _
    $region13: #{tpu_custom_call.1} parent=1 // pred_fallthru
      _
    // Predicated region
    $region14: #{tpu_custom_call.1} parent=1 // pred_check
      _
    $region15: #{tpu_custom_call.1} parent=1 // pred_check_branch
      %19 = sbr.rel (0) target = $region17
    $region16: #{tpu_custom_call.1} parent=1 // pred_region
      _
    $region17: #{tpu_custom_call.1} parent=1 // pred_fallthru
      _
    // Predicated region
    $region18: #{tpu_custom_call.1} parent=1 // pred_check
      _
    $region19: #{tpu_custom_call.1} parent=1 // pred_check_branch
      %21 = sbr.rel (0) target = $region21
    $region20: #{tpu_custom_call.1} parent=1 // pred_region
      _
    $region21: #{tpu_custom_call.1} parent=1 // pred_fallthru
      _
    // Predicated region
    $region22: #{tpu_custom_call.1} parent=1 // pred_check
      _
    $region23: #{tpu_custom_call.1} parent=1 // pred_check_branch
      %23 = sbr.rel (0) target = $region25
    $region24: #{tpu_custom_call.1} parent=1 // pred_region
      _
    $region25: #{tpu_custom_call.1} parent=1 // pred_fallthru
      _
    %p25 = scmp.eq.s32.totalorder 0, 0
    %p26 = scmp.eq.s32.totalorder 0, 0
    %p27 = pnand %p25, %p26
    %p28 = pneg %p27
    // Predicated region
    $region26: #{tpu_custom_call.1} parent=1 // pred_check
      _
    $region27: #{tpu_custom_call.1} parent=1 // pred_check_branch
      %30 = sbr.rel (%p27) target = $region29
    $region28: #{tpu_custom_call.1} parent=1 // pred_region
      %v31 = vld [vmem:[%s0] sm:$0xf]
      %v32 = vld [vmem:[%s0 + $0x4] sm:$0xf]
      %v33 = vld [vmem:[%s0 + $0x8] sm:$0xf]
      %v34 = vld [vmem:[%s0 + $0xc] sm:$0xf]
      %v35 = vld [vmem:[%s0 + $0x10] sm:$0xf]
      %v36 = vld [vmem:[%s0 + $0x14] sm:$0xf]
      %v37 = vld [vmem:[%s0 + $0x18] sm:$0xf]
      %v38 = vld [vmem:[%s0 + $0x1c] sm:$0xf]
      %v39 = vld [vmem:[%s2] sm:$0xf]
      %v40 = vld [vmem:[%s2 + $0x4] sm:$0xf]
      %v41 = vld [vmem:[%s2 + $0x8] sm:$0xf]
      %v42 = vld [vmem:[%s2 + $0xc] sm:$0xf]
      %v43 = vld [vmem:[%s3] sm:$0x1]
      %v45 = vlaneseq
      %v46 = vshrl.u32 %v45, 7
      %v47 = vsub.s32 0, %v46
      %v48 = vrot.slane %v43, %v47
      %v58 = vunpack.c.l.b16 %v31
      %v59 = vunpack.c.l.b16 %v32
      %v60 = vunpack.c.l.b16 %v33
      %v61 = vunpack.c.l.b16 %v34
      %v62 = vunpack.c.l.b16 %v35
      %v63 = vunpack.c.l.b16 %v36
      %v64 = vunpack.c.l.b16 %v37
      %v65 = vunpack.c.l.b16 %v38
      %v66 = vpack.c.b16 %v59, %v58
      %v67 = vpack.c.b16 %v61, %v60
      %v68 = vpack.c.b16 %v63, %v62
      %v69 = vpack.c.b16 %v65, %v64
      %v74 = vunpack.c.l.b16 %v39
      %v75 = vunpack.c.l.b16 %v40
      %v76 = vunpack.c.l.b16 %v41
      %v77 = vunpack.c.l.b16 %v42
      %v78 = vpack.c.b16 %v75, %v74
      %v79 = vpack.c.b16 %v77, %v76
      %vm82 = vcmask 261120
      %v84 = vsel %vm82, %v66, 0
      %v87 = vsel %vm82, %v67, 0
      %v90 = vsel %vm82, %v68, 0
      %v93 = vsel %vm82, %v69, 0
      %95 = vmatprep.subr.bf16.mxu0 0
      %96 = vmatpush1.bf16.msra.mxu0 %v78
      %97 = vmatprep.subr.bf16.mxu0 0
      %98 = vmatpush1.bf16.msra.mxu0 %v79
      %99 = vmatprep.subr.bf16.mxu0 0
      %100 = vmatpush1.bf16.msra.mxu0 0
      %101 = vmatprep.subr.bf16.mxu0 0
      %102 = vmatpush1.bf16.msra.mxu0 0
      %103 = vmatprep.subr.bf16.mxu0 0
      %104 = vmatpush1.bf16.msra.mxu0 0
      %105 = vmatprep.subr.bf16.mxu0 0
      %106 = vmatpush1.bf16.msra.mxu0 0
      %107 = vmatprep.subr.bf16.mxu0 0
      %108 = vmatpush1.bf16.msra.mxu0 0
      %109 = vmatprep.subr.bf16.mxu0 0
      %110 = vmatpush1.bf16.msra.mxu0 0
      %111 = vmatprep.subr.bf16.mxu0 0
      %112 = vmatpush1.bf16.msra.mxu0 0
      %113 = vmatprep.subr.bf16.mxu0 0
      %114 = vmatpush1.bf16.msra.mxu0 0
      %115 = vmatprep.subr.bf16.mxu0 0
      %116 = vmatpush1.bf16.msra.mxu0 0
      %117 = vmatprep.subr.bf16.mxu0 0
      %118 = vmatpush1.bf16.msra.mxu0 0
      %119 = vmatprep.subr.bf16.mxu0 0
      %120 = vmatpush1.bf16.msra.mxu0 0
      %121 = vmatprep.subr.bf16.mxu0 0
      %122 = vmatpush1.bf16.msra.mxu0 0
      %123 = vmatprep.subr.bf16.mxu0 0
      %124 = vmatpush1.bf16.msra.mxu0 0
      %125 = vmatprep.subr.bf16.mxu0 0
      %126 = vmatpush1.bf16.msra.mxu0 0
      %127 = vmatprep.mubr.bf16.mxu0 0
      %128 = vmatmul.mubr.bf16.gmra.mrb[0].mxu0 %v84
      %v129 = vpop.f32.mrb[0].mxu0
      %v130 = vadd.f32 %v48, %v129
      %v131 = vpop.f32.mrb[0].mxu0
      %v132 = vpop.f32.mrb[0].mxu0
      %v133 = vadd.f32 %v48, %v132
      %v134 = vpop.f32.mrb[0].mxu0
      %135 = vmatprep.mubr.bf16.mxu0 0
      %136 = vmatmul.mubr.bf16.gmra.mrb[0].mxu0 %v87
      %v137 = vpop.f32.mrb[0].mxu0
      %v138 = vadd.f32 %v48, %v137
      %v139 = vpop.f32.mrb[0].mxu0
      %v140 = vpop.f32.mrb[0].mxu0
      %v141 = vadd.f32 %v48, %v140
      %v142 = vpop.f32.mrb[0].mxu0
      %143 = vmatprep.mubr.bf16.mxu0 0
      %144 = vmatmul.mubr.bf16.gmra.mrb[0].mxu0 %v90
      %v145 = vpop.f32.mrb[0].mxu0
      %v146 = vadd.f32 %v48, %v145
      %v147 = vpop.f32.mrb[0].mxu0
      %v148 = vpop.f32.mrb[0].mxu0
      %v149 = vadd.f32 %v48, %v148
      %v150 = vpop.f32.mrb[0].mxu0
      %151 = vmatprep.mubr.bf16.mxu0 0
      %152 = vmatmul.mubr.bf16.gmra.mrb[0].mxu0 %v93
      %v153 = vpop.f32.mrb[0].mxu0
      %v154 = vadd.f32 %v48, %v153
      %v155 = vpop.f32.mrb[0].mxu0
      %v156 = vpop.f32.mrb[0].mxu0
      %v157 = vadd.f32 %v48, %v156
      %v158 = vpop.f32.mrb[0].mxu0
      %159 = vdwg.mxu0
      %v160 = vmax.f32 %v130, 0.0
      %v161 = vmax.f32 %v133, 0.0
      %v162 = vmax.f32 %v138, 0.0
      %v163 = vmax.f32 %v141, 0.0
      %v164 = vmax.f32 %v146, 0.0
      %v165 = vmax.f32 %v149, 0.0
      %v166 = vmax.f32 %v154, 0.0
      %v167 = vmax.f32 %v157, 0.0
      %v168 = vpack.c.bf16 %v161, %v160
      %v169 = vpack.c.bf16 %v163, %v162
      %v170 = vpack.c.bf16 %v165, %v164
      %v171 = vpack.c.bf16 %v167, %v166
      %172 = vst.msk [vmem:[#allocation2] sm:$0xff] %vm82, %v168
      %173 = vst.msk [vmem:[#allocation2 + $0x8] sm:$0xff] %vm82, %v169
      %174 = vst.msk [vmem:[#allocation2 + $0x10] sm:$0xff] %vm82, %v170
      %175 = vst.msk [vmem:[#allocation2 + $0x18] sm:$0xff] %vm82, %v171
      %vm176 = vcmask 7168
      %177 = vst.msk [vmem:[#allocation3] sm:$0xff] %vm176, -inf
      %178 = vst.msk [vmem:[#allocation3 + $0x8] sm:$0xff] %vm176, -inf
      %179 = vst.msk [vmem:[#allocation3 + $0x10] sm:$0xff] %vm176, -inf
      %180 = vst.msk [vmem:[#allocation3 + $0x18] sm:$0xff] %vm176, -inf
      %181 = vst.msk [vmem:[#allocation3 + $0x20] sm:$0xff] %vm176, -inf
      %182 = vst.msk [vmem:[#allocation3 + $0x28] sm:$0xff] %vm176, -inf
      %183 = vst.msk [vmem:[#allocation3 + $0x30] sm:$0xff] %vm176, -inf
      %184 = vst.msk [vmem:[#allocation3 + $0x38] sm:$0xff] %vm176, -inf
      %185 = vst.msk [vmem:[#allocation4] sm:$0xff] %vm176, 0.0
      %186 = vst.msk [vmem:[#allocation4 + $0x8] sm:$0xff] %vm176, 0.0
      %187 = vst.msk [vmem:[#allocation4 + $0x10] sm:$0xff] %vm176, 0.0
      %188 = vst.msk [vmem:[#allocation4 + $0x18] sm:$0xff] %vm176, 0.0
      %189 = vst.msk [vmem:[#allocation4 + $0x20] sm:$0xff] %vm176, 0.0
      %190 = vst.msk [vmem:[#allocation4 + $0x28] sm:$0xff] %vm176, 0.0
      %191 = vst.msk [vmem:[#allocation4 + $0x30] sm:$0xff] %vm176, 0.0
      %192 = vst.msk [vmem:[#allocation4 + $0x38] sm:$0xff] %vm176, 0.0
    $region29: #{tpu_custom_call.1} parent=1 // pred_fallthru
      _
    %v193 = vld [vmem:[#allocation2] sm:$0xff]
    %v194 = vld [vmem:[#allocation2 + $0x8] sm:$0xff]
    %v195 = vld [vmem:[#allocation2 + $0x10] sm:$0xff]
    %v196 = vld [vmem:[#allocation2 + $0x18] sm:$0xff]
    %v197 = vld [vmem:[%s4] sm:$0xf]
    %v198 = vld [vmem:[%s4 + $0x4] sm:$0xf]
    %v199 = vld [vmem:[%s4 + $0x8] sm:$0xf]
    %v200 = vld [vmem:[%s4 + $0xc] sm:$0xf]
    %v201 = vld [vmem:[%s5] sm:$0x1]
    %v203 = vlaneseq
    %v204 = vshrl.u32 %v203, 7
    %v205 = vsub.s32 0, %v204
    %v206 = vrot.slane %v201, %v205
    %v212 = vunpack.c.l.b16 %v197
    %v213 = vunpack.c.l.b16 %v198
    %v214 = vunpack.c.l.b16 %v199
    %v215 = vunpack.c.l.b16 %v200
    %v216 = vpack.c.b16 %v213, %v212
    %v217 = vpack.c.b16 %v215, %v214
    %vm220 = vcmask 261120
    %v222 = vsel %vm220, %v193, 0
    %v225 = vsel %vm220, %v194, 0
    %v228 = vsel %vm220, %v195, 0
    %v231 = vsel %vm220, %v196, 0
    %233 = vmatprep.subr.bf16.mxu0 0
    %234 = vmatpush1.bf16.msra.mxu0 %v216
    %235 = vmatprep.subr.bf16.mxu0 0
    %236 = vmatpush1.bf16.msra.mxu0 %v217
    %237 = vmatprep.subr.bf16.mxu0 0
    %238 = vmatpush1.bf16.msra.mxu0 0
    %239 = vmatprep.subr.bf16.mxu0 0
    %240 = vmatpush1.bf16.msra.mxu0 0
    %241 = vmatprep.subr.bf16.mxu0 0
    %242 = vmatpush1.bf16.msra.mxu0 0
    %243 = vmatprep.subr.bf16.mxu0 0
    %244 = vmatpush1.bf16.msra.mxu0 0
    %245 = vmatprep.subr.bf16.mxu0 0
    %246 = vmatpush1.bf16.msra.mxu0 0
    %247 = vmatprep.subr.bf16.mxu0 0
    %248 = vmatpush1.bf16.msra.mxu0 0
    %249 = vmatprep.subr.bf16.mxu0 0
    %250 = vmatpush1.bf16.msra.mxu0 0
    %251 = vmatprep.subr.bf16.mxu0 0
    %252 = vmatpush1.bf16.msra.mxu0 0
    %253 = vmatprep.subr.bf16.mxu0 0
    %254 = vmatpush1.bf16.msra.mxu0 0
    %255 = vmatprep.subr.bf16.mxu0 0
    %256 = vmatpush1.bf16.msra.mxu0 0
    %257 = vmatprep.subr.bf16.mxu0 0
    %258 = vmatpush1.bf16.msra.mxu0 0
    %259 = vmatprep.subr.bf16.mxu0 0
    %260 = vmatpush1.bf16.msra.mxu0 0
    %261 = vmatprep.subr.bf16.mxu0 0
    %262 = vmatpush1.bf16.msra.mxu0 0
    %263 = vmatprep.subr.bf16.mxu0 0
    %264 = vmatpush1.bf16.msra.mxu0 0
    %265 = vmatprep.mubr.bf16.mxu0 0
    %266 = vmatmul.mubr.bf16.gmra.mrb[0].mxu0 %v222
    %v267 = vpop.f32.mrb[0].mxu0
    %v268 = vadd.f32 %v206, %v267
    %v269 = vpop.f32.mrb[0].mxu0
    %v270 = vpop.f32.mrb[0].mxu0
    %v271 = vadd.f32 %v206, %v270
    %v272 = vpop.f32.mrb[0].mxu0
    %273 = vmatprep.mubr.bf16.mxu0 0
    %274 = vmatmul.mubr.bf16.gmra.mrb[0].mxu0 %v225
    %v275 = vpop.f32.mrb[0].mxu0
    %v276 = vadd.f32 %v206, %v275
    %v277 = vpop.f32.mrb[0].mxu0
    %v278 = vpop.f32.mrb[0].mxu0
    %v279 = vadd.f32 %v206, %v278
    %v280 = vpop.f32.mrb[0].mxu0
    %281 = vmatprep.mubr.bf16.mxu0 0
    %282 = vmatmul.mubr.bf16.gmra.mrb[0].mxu0 %v228
    %v283 = vpop.f32.mrb[0].mxu0
    %v284 = vadd.f32 %v206, %v283
    %v285 = vpop.f32.mrb[0].mxu0
    %v286 = vpop.f32.mrb[0].mxu0
    %v287 = vadd.f32 %v206, %v286
    %v288 = vpop.f32.mrb[0].mxu0
    %289 = vmatprep.mubr.bf16.mxu0 0
    %290 = vmatmul.mubr.bf16.gmra.mrb[0].mxu0 %v231
    %v291 = vpop.f32.mrb[0].mxu0
    %v292 = vadd.f32 %v206, %v291
    %v293 = vpop.f32.mrb[0].mxu0
    %v294 = vpop.f32.mrb[0].mxu0
    %v295 = vadd.f32 %v206, %v294
    %v296 = vpop.f32.mrb[0].mxu0
    %297 = vdwg.mxu0
    // Predicated region
    $region30: #{tpu_custom_call.1} parent=1 // pred_check
      %p298 = pneg %p25
    $region31: #{tpu_custom_call.1} parent=1 // pred_check_branch
      %300 = sbr.rel (%p298) target = $region33
    $region32: #{tpu_custom_call.1} parent=1 // pred_region
      %v301 = vld [vmem:[#allocation3] sm:$0xff]
      %v302 = vld [vmem:[#allocation3 + $0x8] sm:$0xff]
      %v303 = vld [vmem:[#allocation3 + $0x10] sm:$0xff]
      %v304 = vld [vmem:[#allocation3 + $0x18] sm:$0xff]
      %v305 = vld [vmem:[#allocation3 + $0x20] sm:$0xff]
      %v306 = vld [vmem:[#allocation3 + $0x28] sm:$0xff]
      %v307 = vld [vmem:[#allocation3 + $0x30] sm:$0xff]
      %v308 = vld [vmem:[#allocation3 + $0x38] sm:$0xff]
      %309 = vmax.xlane.f32.xlu0 %v268
      %v310 = vpop.xlane.xlu0 %309
      %311 = vmax.xlane.f32.xlu0 %v271
      %v312 = vpop.xlane.xlu0 %311
      %313 = vmax.xlane.f32.xlu0 %v276
      %v314 = vpop.xlane.xlu0 %313
      %315 = vmax.xlane.f32.xlu0 %v279
      %v316 = vpop.xlane.xlu0 %315
      %317 = vmax.xlane.f32.xlu0 %v284
      %v318 = vpop.xlane.xlu0 %317
      %319 = vmax.xlane.f32.xlu0 %v287
      %v320 = vpop.xlane.xlu0 %319
      %321 = vmax.xlane.f32.xlu0 %v292
      %v322 = vpop.xlane.xlu0 %321
      %323 = vmax.xlane.f32.xlu0 %v295
      %v324 = vpop.xlane.xlu0 %323
      %v325 = vmax.f32 %v301, %v310
      %v326 = vmax.f32 %v302, %v312
      %v327 = vmax.f32 %v303, %v314
      %v328 = vmax.f32 %v304, %v316
      %v329 = vmax.f32 %v305, %v318
      %v330 = vmax.f32 %v306, %v320
      %v331 = vmax.f32 %v307, %v322
      %v332 = vmax.f32 %v308, %v324
      %v333 = vld [vmem:[#allocation4] sm:$0xff]
      %v334 = vld [vmem:[#allocation4 + $0x8] sm:$0xff]
      %v335 = vld [vmem:[#allocation4 + $0x10] sm:$0xff]
      %v336 = vld [vmem:[#allocation4 + $0x18] sm:$0xff]
      %v337 = vld [vmem:[#allocation4 + $0x20] sm:$0xff]
      %v338 = vld [vmem:[#allocation4 + $0x28] sm:$0xff]
      %v339 = vld [vmem:[#allocation4 + $0x30] sm:$0xff]
      %v340 = vld [vmem:[#allocation4 + $0x38] sm:$0xff]
      %v341 = vsub.f32 %v301, %v325
      %v342 = vsub.f32 %v302, %v326
      %v343 = vsub.f32 %v303, %v327
      %v344 = vsub.f32 %v304, %v328
      %v345 = vsub.f32 %v305, %v329
      %v346 = vsub.f32 %v306, %v330
      %v347 = vsub.f32 %v307, %v331
      %v348 = vsub.f32 %v308, %v332
      %v349 = vmul.f32 %v341, 1.442695
      %v350 = vpow.pop %v349
      %v351 = vmul.f32 %v342, 1.442695
      %v352 = vpow.pop %v351
      %v353 = vmul.f32 %v343, 1.442695
      %v354 = vpow.pop %v353
      %v355 = vmul.f32 %v344, 1.442695
      %v356 = vpow.pop %v355
      %v357 = vmul.f32 %v345, 1.442695
      %v358 = vpow.pop %v357
      %v359 = vmul.f32 %v346, 1.442695
      %v360 = vpow.pop %v359
      %v361 = vmul.f32 %v347, 1.442695
      %v362 = vpow.pop %v361
      %v363 = vmul.f32 %v348, 1.442695
      %v364 = vpow.pop %v363
      %v365 = vmul.f32 %v333, %v350
      %v366 = vmul.f32 %v334, %v352
      %v367 = vmul.f32 %v335, %v354
      %v368 = vmul.f32 %v336, %v356
      %v369 = vmul.f32 %v337, %v358
      %v370 = vmul.f32 %v338, %v360
      %v371 = vmul.f32 %v339, %v362
      %v372 = vmul.f32 %v340, %v364
      %374 = vset.pattern.permute.xlu0 0
      %375 = vperm.xlu0 %374, %v325
      %v376 = vpop.permute.xlu0 %375
      %379 = vset.pattern.permute.xlu0 0
      %380 = vperm.xlu0 %379, %v326
      %v381 = vpop.permute.xlu0 %380
      %384 = vset.pattern.permute.xlu0 0
      %385 = vperm.xlu0 %384, %v327
      %v386 = vpop.permute.xlu0 %385
      %389 = vset.pattern.permute.xlu0 0
      %390 = vperm.xlu0 %389, %v328
      %v391 = vpop.permute.xlu0 %390
      %394 = vset.pattern.permute.xlu0 0
      %395 = vperm.xlu0 %394, %v329
      %v396 = vpop.permute.xlu0 %395
      %399 = vset.pattern.permute.xlu0 0
      %400 = vperm.xlu0 %399, %v330
      %v401 = vpop.permute.xlu0 %400
      %404 = vset.pattern.permute.xlu0 0
      %405 = vperm.xlu0 %404, %v331
      %v406 = vpop.permute.xlu0 %405
      %409 = vset.pattern.permute.xlu0 0
      %410 = vperm.xlu0 %409, %v332
      %v411 = vpop.permute.xlu0 %410
      %v413 = vsub.f32 %v268, %v376
      %v414 = vsub.f32 %v271, %v381
      %v415 = vsub.f32 %v276, %v386
      %v416 = vsub.f32 %v279, %v391
      %v417 = vsub.f32 %v284, %v396
      %v418 = vsub.f32 %v287, %v401
      %v419 = vsub.f32 %v292, %v406
      %v420 = vsub.f32 %v295, %v411
      %v421 = vmul.f32 %v413, 1.442695
      %v422 = vpow.pop %v421
      %v423 = vmul.f32 %v414, 1.442695
      %v424 = vpow.pop %v423
      %v425 = vmul.f32 %v415, 1.442695
      %v426 = vpow.pop %v425
      %v427 = vmul.f32 %v416, 1.442695
      %v428 = vpow.pop %v427
      %v429 = vmul.f32 %v417, 1.442695
      %v430 = vpow.pop %v429
      %v431 = vmul.f32 %v418, 1.442695
      %v432 = vpow.pop %v431
      %v433 = vmul.f32 %v419, 1.442695
      %v434 = vpow.pop %v433
      %v435 = vmul.f32 %v420, 1.442695
      %v436 = vpow.pop %v435
      %437 = vadd.xlane.f32.xlu0 %v422
      %v438 = vpop.xlane.xlu0 %437
      %439 = vadd.xlane.f32.xlu0 %v424
      %v440 = vpop.xlane.xlu0 %439
      %441 = vadd.xlane.f32.xlu0 %v426
      %v442 = vpop.xlane.xlu0 %441
      %443 = vadd.xlane.f32.xlu0 %v428
      %v444 = vpop.xlane.xlu0 %443
      %445 = vadd.xlane.f32.xlu0 %v430
      %v446 = vpop.xlane.xlu0 %445
      %447 = vadd.xlane.f32.xlu0 %v432
      %v448 = vpop.xlane.xlu0 %447
      %449 = vadd.xlane.f32.xlu0 %v434
      %v450 = vpop.xlane.xlu0 %449
      %451 = vadd.xlane.f32.xlu0 %v436
      %v452 = vpop.xlane.xlu0 %451
      %v453 = vadd.f32 %v365, %v438
      %v454 = vadd.f32 %v366, %v440
      %v455 = vadd.f32 %v367, %v442
      %v456 = vadd.f32 %v368, %v444
      %v457 = vadd.f32 %v369, %v446
      %v458 = vadd.f32 %v370, %v448
      %v459 = vadd.f32 %v371, %v450
      %v460 = vadd.f32 %v372, %v452
      %vm461 = vcmask 7168
      %462 = vst.msk [vmem:[#allocation4] sm:$0xff] %vm461, %v453
      %463 = vst.msk [vmem:[#allocation4 + $0x8] sm:$0xff] %vm461, %v454
      %464 = vst.msk [vmem:[#allocation4 + $0x10] sm:$0xff] %vm461, %v455
      %465 = vst.msk [vmem:[#allocation4 + $0x18] sm:$0xff] %vm461, %v456
      %466 = vst.msk [vmem:[#allocation4 + $0x20] sm:$0xff] %vm461, %v457
      %467 = vst.msk [vmem:[#allocation4 + $0x28] sm:$0xff] %vm461, %v458
      %468 = vst.msk [vmem:[#allocation4 + $0x30] sm:$0xff] %vm461, %v459
      %469 = vst.msk [vmem:[#allocation4 + $0x38] sm:$0xff] %vm461, %v460
      %470 = vst.msk [vmem:[#allocation3] sm:$0xff] %vm461, %v325
      %471 = vst.msk [vmem:[#allocation3 + $0x8] sm:$0xff] %vm461, %v326
      %472 = vst.msk [vmem:[#allocation3 + $0x10] sm:$0xff] %vm461, %v327
      %473 = vst.msk [vmem:[#allocation3 + $0x18] sm:$0xff] %vm461, %v328
      %474 = vst.msk [vmem:[#allocation3 + $0x20] sm:$0xff] %vm461, %v329
      %475 = vst.msk [vmem:[#allocation3 + $0x28] sm:$0xff] %vm461, %v330
      %476 = vst.msk [vmem:[#allocation3 + $0x30] sm:$0xff] %vm461, %v331
      %477 = vst.msk [vmem:[#allocation3 + $0x38] sm:$0xff] %vm461, %v332
    $region33: #{tpu_custom_call.1} parent=1 // pred_fallthru
      _
    // Predicated region
    $region34: #{tpu_custom_call.1} parent=1 // pred_check
      _
    $region35: #{tpu_custom_call.1} parent=1 // pred_check_branch
      %479 = sbr.rel (%p27) target = $region37
    $region36: #{tpu_custom_call.1} parent=1 // pred_region
      %v480 = vld [vmem:[%s1] sm:$0xff]
      %v481 = vld [vmem:[%s1 + $0x8] sm:$0xff]
      %v482 = vld [vmem:[%s1 + $0x10] sm:$0xff]
      %v483 = vld [vmem:[%s1 + $0x18] sm:$0xff]
      %v484 = vld [vmem:[%s1 + $0x20] sm:$0xff]
      %v485 = vld [vmem:[%s1 + $0x28] sm:$0xff]
      %v486 = vld [vmem:[%s1 + $0x30] sm:$0xff]
      %v487 = vld [vmem:[%s1 + $0x38] sm:$0xff]
      %v488 = vld [vmem:[#allocation4] sm:$0xff]
      %v489 = vld [vmem:[#allocation4 + $0x8] sm:$0xff]
      %v490 = vld [vmem:[#allocation4 + $0x10] sm:$0xff]
      %v491 = vld [vmem:[#allocation4 + $0x18] sm:$0xff]
      %v492 = vld [vmem:[#allocation4 + $0x20] sm:$0xff]
      %v493 = vld [vmem:[#allocation4 + $0x28] sm:$0xff]
      %v494 = vld [vmem:[#allocation4 + $0x30] sm:$0xff]
      %v495 = vld [vmem:[#allocation4 + $0x38] sm:$0xff]
      %v496 = vrcp.pop %v488
      %v497 = vrcp.pop %v489
      %v498 = vrcp.pop %v490
      %v499 = vrcp.pop %v491
      %v500 = vrcp.pop %v492
      %v501 = vrcp.pop %v493
      %v502 = vrcp.pop %v494
      %v503 = vrcp.pop %v495
      %v504 = vmul.f32 %v480, %v496
      %v505 = vmul.f32 %v481, %v497
      %v506 = vmul.f32 %v482, %v498
      %v507 = vmul.f32 %v483, %v499
      %v508 = vmul.f32 %v484, %v500
      %v509 = vmul.f32 %v485, %v501
      %v510 = vmul.f32 %v486, %v502
      %v511 = vmul.f32 %v487, %v503
      %vm512 = vcmask 7168
      %513 = vst.msk [vmem:[#allocation5] sm:$0xff] %vm512, %v504
      %514 = vst.msk [vmem:[#allocation5 + $0x8] sm:$0xff] %vm512, %v505
      %515 = vst.msk [vmem:[#allocation5 + $0x10] sm:$0xff] %vm512, %v506
      %516 = vst.msk [vmem:[#allocation5 + $0x18] sm:$0xff] %vm512, %v507
      %517 = vst.msk [vmem:[#allocation5 + $0x20] sm:$0xff] %vm512, %v508
      %518 = vst.msk [vmem:[#allocation5 + $0x28] sm:$0xff] %vm512, %v509
      %519 = vst.msk [vmem:[#allocation5 + $0x30] sm:$0xff] %vm512, %v510
      %520 = vst.msk [vmem:[#allocation5 + $0x38] sm:$0xff] %vm512, %v511
    $region37: #{tpu_custom_call.1} parent=1 // pred_fallthru
      _
    // Predicated region
    $region38: #{tpu_custom_call.1} parent=1 // pred_check
      %p521 = pneg %p25
    $region39: #{tpu_custom_call.1} parent=1 // pred_check_branch
      %523 = sbr.rel (%p521) target = $region41
    $region40: #{tpu_custom_call.1} parent=1 // pred_region
      %v524 = vld [vmem:[#allocation3] sm:$0xff]
      %v525 = vld [vmem:[#allocation3 + $0x8] sm:$0xff]
      %v526 = vld [vmem:[#allocation3 + $0x10] sm:$0xff]
      %v527 = vld [vmem:[#allocation3 + $0x18] sm:$0xff]
      %v528 = vld [vmem:[#allocation3 + $0x20] sm:$0xff]
      %v529 = vld [vmem:[#allocation3 + $0x28] sm:$0xff]
      %v530 = vld [vmem:[#allocation3 + $0x30] sm:$0xff]
      %v531 = vld [vmem:[#allocation3 + $0x38] sm:$0xff]
      %533 = vset.pattern.permute.xlu0 0
      %534 = vperm.xlu0 %533, %v524
      %v535 = vpop.permute.xlu0 %534
      %538 = vset.pattern.permute.xlu0 0
      %539 = vperm.xlu0 %538, %v525
      %v540 = vpop.permute.xlu0 %539
      %543 = vset.pattern.permute.xlu0 0
      %544 = vperm.xlu0 %543, %v526
      %v545 = vpop.permute.xlu0 %544
      %548 = vset.pattern.permute.xlu0 0
      %549 = vperm.xlu0 %548, %v527
      %v550 = vpop.permute.xlu0 %549
      %553 = vset.pattern.permute.xlu0 0
      %554 = vperm.xlu0 %553, %v528
      %v555 = vpop.permute.xlu0 %554
      %558 = vset.pattern.permute.xlu0 0
      %559 = vperm.xlu0 %558, %v529
      %v560 = vpop.permute.xlu0 %559
      %563 = vset.pattern.permute.xlu0 0
      %564 = vperm.xlu0 %563, %v530
      %v565 = vpop.permute.xlu0 %564
      %568 = vset.pattern.permute.xlu0 0
      %569 = vperm.xlu0 %568, %v531
      %v570 = vpop.permute.xlu0 %569
      %v572 = vsub.f32 %v268, %v535
      %v573 = vsub.f32 %v271, %v540
      %v574 = vsub.f32 %v276, %v545
      %v575 = vsub.f32 %v279, %v550
      %v576 = vsub.f32 %v284, %v555
      %v577 = vsub.f32 %v287, %v560
      %v578 = vsub.f32 %v292, %v565
      %v579 = vsub.f32 %v295, %v570
      %v580 = vmul.f32 %v572, 1.442695
      %v581 = vpow.pop %v580
      %v582 = vmul.f32 %v573, 1.442695
      %v583 = vpow.pop %v582
      %v584 = vmul.f32 %v574, 1.442695
      %v585 = vpow.pop %v584
      %v586 = vmul.f32 %v575, 1.442695
      %v587 = vpow.pop %v586
      %v588 = vmul.f32 %v576, 1.442695
      %v589 = vpow.pop %v588
      %v590 = vmul.f32 %v577, 1.442695
      %v591 = vpow.pop %v590
      %v592 = vmul.f32 %v578, 1.442695
      %v593 = vpow.pop %v592
      %v594 = vmul.f32 %v579, 1.442695
      %v595 = vpow.pop %v594
      %v596 = vld [vmem:[#allocation5] sm:$0xff]
      %v597 = vld [vmem:[#allocation5 + $0x8] sm:$0xff]
      %v598 = vld [vmem:[#allocation5 + $0x10] sm:$0xff]
      %v599 = vld [vmem:[#allocation5 + $0x18] sm:$0xff]
      %v600 = vld [vmem:[#allocation5 + $0x20] sm:$0xff]
      %v601 = vld [vmem:[#allocation5 + $0x28] sm:$0xff]
      %v602 = vld [vmem:[#allocation5 + $0x30] sm:$0xff]
      %v603 = vld [vmem:[#allocation5 + $0x38] sm:$0xff]
      %605 = vset.pattern.permute.xlu0 0
      %606 = vperm.xlu0 %605, %v596
      %v607 = vpop.permute.xlu0 %606
      %610 = vset.pattern.permute.xlu0 0
      %611 = vperm.xlu0 %610, %v597
      %v612 = vpop.permute.xlu0 %611
      %615 = vset.pattern.permute.xlu0 0
      %616 = vperm.xlu0 %615, %v598
      %v617 = vpop.permute.xlu0 %616
      %620 = vset.pattern.permute.xlu0 0
      %621 = vperm.xlu0 %620, %v599
      %v622 = vpop.permute.xlu0 %621
      %625 = vset.pattern.permute.xlu0 0
      %626 = vperm.xlu0 %625, %v600
      %v627 = vpop.permute.xlu0 %626
      %630 = vset.pattern.permute.xlu0 0
      %631 = vperm.xlu0 %630, %v601
      %v632 = vpop.permute.xlu0 %631
      %635 = vset.pattern.permute.xlu0 0
      %636 = vperm.xlu0 %635, %v602
      %v637 = vpop.permute.xlu0 %636
      %640 = vset.pattern.permute.xlu0 0
      %641 = vperm.xlu0 %640, %v603
      %v642 = vpop.permute.xlu0 %641
      %v644 = vmul.f32 %v581, %v607
      %v645 = vmul.f32 %v583, %v612
      %v646 = vmul.f32 %v585, %v617
      %v647 = vmul.f32 %v587, %v622
      %v648 = vmul.f32 %v589, %v627
      %v649 = vmul.f32 %v591, %v632
      %v650 = vmul.f32 %v593, %v637
      %v651 = vmul.f32 %v595, %v642
      %v652 = vrot.slane %v644, 4
      %v653 = vadd.f32 %v644, %v652
      %v654 = vrot.slane %v653, 2
      %v655 = vadd.f32 %v653, %v654
      %v656 = vrot.slane %v655, 1
      %v657 = vadd.f32 %v655, %v656
      %v658 = vrot.slane %v645, 4
      %v659 = vadd.f32 %v645, %v658
      %v660 = vrot.slane %v659, 2
      %v661 = vadd.f32 %v659, %v660
      %v662 = vrot.slane %v661, 1
      %v663 = vadd.f32 %v661, %v662
      %v664 = vrot.slane %v646, 4
      %v665 = vadd.f32 %v646, %v664
      %v666 = vrot.slane %v665, 2
      %v667 = vadd.f32 %v665, %v666
      %v668 = vrot.slane %v667, 1
      %v669 = vadd.f32 %v667, %v668
      %v670 = vrot.slane %v647, 4
      %v671 = vadd.f32 %v647, %v670
      %v672 = vrot.slane %v671, 2
      %v673 = vadd.f32 %v671, %v672
      %v674 = vrot.slane %v673, 1
      %v675 = vadd.f32 %v673, %v674
      %v676 = vrot.slane %v648, 4
      %v677 = vadd.f32 %v648, %v676
      %v678 = vrot.slane %v677, 2
      %v679 = vadd.f32 %v677, %v678
      %v680 = vrot.slane %v679, 1
      %v681 = vadd.f32 %v679, %v680
      %v682 = vrot.slane %v649, 4
      %v683 = vadd.f32 %v649, %v682
      %v684 = vrot.slane %v683, 2
      %v685 = vadd.f32 %v683, %v684
      %v686 = vrot.slane %v685, 1
      %v687 = vadd.f32 %v685, %v686
      %v688 = vrot.slane %v650, 4
      %v689 = vadd.f32 %v650, %v688
      %v690 = vrot.slane %v689, 2
      %v691 = vadd.f32 %v689, %v690
      %v692 = vrot.slane %v691, 1
      %v693 = vadd.f32 %v691, %v692
      %v694 = vrot.slane %v651, 4
      %v695 = vadd.f32 %v651, %v694
      %v696 = vrot.slane %v695, 2
      %v697 = vadd.f32 %v695, %v696
      %v698 = vrot.slane %v697, 1
      %v699 = vadd.f32 %v697, %v698
      %vm708 = vcmask 1041409
      %v709 = vsel %vm708, %v663, %v657
      %vm710 = vcmask 1042434
      %v711 = vsel %vm710, %v669, %v709
      %vm712 = vcmask 1043459
      %v713 = vsel %vm712, %v675, %v711
      %vm714 = vcmask 1044484
      %v715 = vsel %vm714, %v681, %v713
      %vm716 = vcmask 1045509
      %v717 = vsel %vm716, %v687, %v715
      %vm718 = vcmask 1046534
      %v719 = vsel %vm718, %v693, %v717
      %vm720 = vcmask 1047559
      %v721 = vsel %vm720, %v699, %v719
      %723 = vst [vmem:[#allocation6] sm:$0xff] %v721
    $region41: #{tpu_custom_call.1} parent=1 // pred_fallthru
      _
    // Predicated region
    $region42: #{tpu_custom_call.1} parent=1 // pred_check
      _
    $region43: #{tpu_custom_call.1} parent=1 // pred_check_branch
      %725 = sbr.rel (0) target = $region45
    $region44: #{tpu_custom_call.1} parent=1 // pred_region
      %s727 = ssub.s32 128, 128
      %728 = vsyncadd [#allocation7], %s727
      %s730 = sshll.u32 [#allocation6], 4
      %s731 = int_to_ptr.vmem [resolvable:$true] %s730
      %733 = dma.vmem_to_hbm [thread:$0]  %s731, 128, %s6, [#allocation7]
    $region45: #{tpu_custom_call.1} parent=1 // pred_fallthru
      _
    // Predicated region
    $region46: #{tpu_custom_call.1} parent=1 // pred_check
      _
    $region47: #{tpu_custom_call.1} parent=1 // pred_check_branch
      %735 = sbr.rel (0) target = $region49
    $region48: #{tpu_custom_call.1} parent=1 // pred_region
      %736 = dma.done [#allocation7], 128
    $region49: #{tpu_custom_call.1} parent=1 // pred_fallthru
      _
    %737 = vsyncpa [#allocation7], 1

</llo_original>
